<compile_context>
chip_gen: v5e
topology: v5e:2x2
jax: 0.10.0
libtpu: 0.0.40
codegen_flags: <defaults>
</compile_context>

<pallas_src>
import functools
import math

import numpy as np

import jax
import jax.numpy as jnp
from jax.experimental import pallas as pl
from jax.experimental.pallas import tpu as pltpu


# ---------------------------------------------------------------------------
# Reference table (numpy; f32-rounded angle exactly like the torch module,
# trig evaluated in float64 on that rounded angle -> "gold" values).
# ---------------------------------------------------------------------------
def _build_pe_reference(embed_dim: int, n_rows: int) -> jnp.ndarray:
    position = np.arange(n_rows, dtype=np.float32)[:, None]                   # (S, 1) f32
    div_term = np.exp(
        np.arange(0, embed_dim, 2, dtype=np.float64) * (-math.log(10000.0) / embed_dim)
    ).astype(np.float32)                                                      # (D/2,) f32
    angle = (position * div_term).astype(np.float64)                          # f32 product, widened
    pe = np.zeros((n_rows, embed_dim), dtype=np.float32)
    pe[:, 0::2] = np.sin(angle)
    pe[:, 1::2] = np.cos(angle)
    return jnp.asarray(pe)


# ---------------------------------------------------------------------------
# Kernel
# ---------------------------------------------------------------------------
_TWO_PI_HI = 6.28125                  # exact in f32 (few significand bits)
_TWO_PI_LO = 0.0019353071795864769    # 2*pi - _TWO_PI_HI
_INV_TWO_PI = 0.15915494309189535     # 1 / (2*pi)


def _pe_add_kernel(x_ref, freq_ref, soff_ref, phase_ref, o_ref, *, rows_per_group):
    # x_ref / o_ref: (tile_g, W) where W = rows_per_group * B * D (lane-dense).
    # freq_ref / soff_ref / phase_ref: (1, W) f32 per-lane constants.
    tile_g, _ = x_ref.shape
    g0 = pl.program_id(0) * tile_g
    # (tile, 1) f32 super-row index; lanes pick it up by broadcast
    # (review micro-opt: no full-tile int32 iota + i32->f32 convert).
    gcol = (jax.lax.broadcasted_iota(jnp.int32, (tile_g, 1), 0) + g0).astype(jnp.float32)
    if rows_per_group == 1:
        s = gcol                                        # exact integer positions
    else:
        # s = g*r + j ; all values < 2^24 so this is exact in f32.
        s = gcol * float(rows_per_group) + soff_ref[...]
    # angle = fl(s * div_term): the same single-rounded f32 argument the
    # reference table uses.
    angle = s * freq_ref[...]
    # Cody-Waite reduction mod 2*pi so adding the pi/2 phase on the cos lanes
    # does not lose ~ulp(angle) (~2e-4 rad at s~5000).  Keeps a single sin per
    # element (sin lowers to a VPU polynomial, not the EUP).
    n = jnp.floor(angle * _INV_TWO_PI + 0.5)
    red = (angle - n * _TWO_PI_HI) - n * _TWO_PI_LO
    pe = jnp.sin(red + phase_ref[...])                  # even d: sin(angle); odd d: cos(angle)
    # TODO(synk): for larger B, evaluate the trig only on the D unique lanes and
    # lane-replicate across batch to cut VPU work further (matters on v7x).
    o_ref[...] = (x_ref[...].astype(jnp.float32) + pe).astype(o_ref.dtype)


# ---------------------------------------------------------------------------
# Wrapper helpers
# ---------------------------------------------------------------------------
def _pick_rows_per_group(S: int, width: int) -> int:
    """Smallest r with (r*width) % 128 == 0 and S % r == 0 (lane-dense regroup)."""
    if width % 128 == 0:
        return 1
    r0 = 128 // math.gcd(width, 128)
    cand = r0
    while cand <= S:
        if S % cand == 0:
            return cand
        cand += r0
    return 1  # e.g. odd S with width=64: fall back to masked lanes


def _tile_defaults() -> tuple:
    """(target block bytes, vmem_limit_bytes or None) per chip generation."""
    kind = ""
    try:
        dev = jax.devices()[0]
        if dev.platform == "tpu":
            kind = dev.device_kind.lower()
    except Exception:
        pass
    if ("v6" in kind) or ("v7" in kind) or ("7x" in kind):
        # v6e (~1.3 TB/s) / v7x (~3.2 TB/s): ~6 MiB blocks amortize the ~0.35 us
        # per-step cost; 4 double-buffered slabs = 24 MiB, raise scoped VMEM
        # explicitly (v7x physical VMEM is only 64 MiB, so pick deliberately).
        return 6 << 20, 40 << 20
    if ("v5" in kind and "lite" in kind) or ("v5e" in kind):
        # v5e (~0.8 TB/s): per-step overhead already <10% at ~3 MiB; stay under
        # the 16 MiB scoped-VMEM default (4 x 3 MiB = 12 MiB).
        return 3 << 20, None
    return 2 << 20, None  # unknown / older: conservative


def _auto_tile_rows(Sg: int, row_bytes: int, target_bytes: int) -> int:
    tr = max(8, (target_bytes // max(1, row_bytes)) // 8 * 8)
    # v7x megacore: keep >=4 grid steps on the single "parallel" axis when the
    # sequence allows, so tiles spread across both TensorCores.
    if Sg >= 32:
        quarter = -(-Sg // 4)
        quarter = max(8, ((quarter + 7) // 8) * 8)
        tr = min(tr, quarter)
    return tr


# ---------------------------------------------------------------------------
# Pallas wrapper
# ---------------------------------------------------------------------------
def _positional_encoding_pallas(x: jnp.ndarray, *, tile_rows=None, alias_input=False) -> jnp.ndarray:
    S, B, D = x.shape
    width = B * D
    r = _pick_rows_per_group(S, width)
    W = r * width
    Sg = S // r
    x2 = x.reshape(Sg, W)  # contiguous regroup: r seq rows per lane-dense block row

    # Per-lane constants for the regrouped layout (lane l = j*B*D + b*D + d).
    half = np.exp(np.arange(0, D, 2, dtype=np.float64) * (-math.log(10000.0) / D))
    freq_d = np.repeat(half, 2).astype(np.float32)                               # (D,)
    phase_d = np.tile(np.array([0.0, np.pi / 2.0], dtype=np.float32), D // 2)     # (D,)
    lane_freq = jnp.asarray(np.tile(freq_d, B * r)[None, :])                      # (1, W)
    lane_soff = jnp.asarray(np.repeat(np.arange(r, dtype=np.float32), B * D)[None, :])
    lane_phase = jnp.asarray(np.tile(phase_d, B * r)[None, :])

    target_bytes, vmem_limit = _tile_defaults()
    itemsize = x.dtype.itemsize  # review fix: was a hardcoded * 4
    if tile_rows is None:
        tile_rows = _auto_tile_rows(Sg, W * itemsize, target_bytes)
    tile_rows = min(int(tile_rows), Sg)
    if tile_rows < Sg and tile_rows % 8 != 0:
        tile_rows = max(8, tile_rows - tile_rows % 8)
        tile_rows = min(tile_rows, Sg)
    grid = (pl.cdiv(Sg, tile_rows),)

    kernel = functools.partial(_pe_add_kernel, rows_per_group=r)
    out2 = pl.pallas_call(
        kernel,
        out_shape=jax.ShapeDtypeStruct((Sg, W), x.dtype),
        grid_spec=pltpu.PrefetchScalarGridSpec(
            num_scalar_prefetch=0,
            grid=grid,
            in_specs=[
                pl.BlockSpec((tile_rows, W), lambda i: (i, 0)),
                pl.BlockSpec((1, W), lambda i: (0, 0)),
                pl.BlockSpec((1, W), lambda i: (0, 0)),
                pl.BlockSpec((1, W), lambda i: (0, 0)),
            ],
            out_specs=pl.BlockSpec((tile_rows, W), lambda i: (i, 0)),
        ),
        compiler_params=pltpu.CompilerParams(
            dimension_semantics=("parallel",),  # independent S-tiles; megacore on v7x
            vmem_limit_bytes=vmem_limit,
        ),
        input_output_aliases=({0: 0} if alias_input else {}),
    )(x2, lane_freq, lane_soff, lane_phase)
    return out2.reshape(S, B, D)


def positional_encoding_forward(
    x: jnp.ndarray,
    max_len: int = 5000,
    *,
    tile_rows=None,
    force_pallas: bool = False,
    min_pallas_bytes: int = 256 * 1024,
    alias_input: bool = False,
) -> jnp.ndarray:
    """x: (S, B, D). Returns x + pe[:S] broadcast over batch (PyTorch semantics)."""
    S, B, D = x.shape
    assert S <= max_len
    assert D % 2 == 0, "embed_dim must be even (same assumption as the PyTorch module)"
    if not force_pallas and x.size * x.dtype.itemsize < min_pallas_bytes:
        # KB-scale tensors: plain XLA-fused broadcast add beats any custom call.
        pe = _build_pe_reference(D, S)[:, None, :]
        return (x.astype(jnp.float32) + pe).astype(x.dtype)
    return _positional_encoding_pallas(x, tile_rows=tile_rows, alias_input=alias_input)


# ---------------------------------------------------------------------------
# Tests
# ---------------------------------------------------------------------------
if __name__ == "__main__":
    key = jax.random.PRNGKey(0)

    # Test 1: module-native shape (S=8, B=2, D=32) -> width 64 regrouped to
    # 128-lane rows (r=2), single grid step.
    S, B, D = 8, 2, 32
    x = jax.random.normal(key, (S, B, D), dtype=jnp.float32)
    out = jax.block_until_ready(positional_encoding_forward(x, force_pallas=True))
    ref = x + _build_pe_reference(D, S)[:, None, :]
    assert out.shape == (S, B, D)
    assert jnp.allclose(out, ref, atol=1e-5), "mismatch (small, regrouped lanes)"

    # Test 2: multi-step grid + ragged last tile with regrouping
    # (S=40 -> Sg=20, tile_rows=8 -> 3 steps, last tile ragged).
    S2, B2, D2 = 40, 2, 32
    x2 = jax.random.normal(jax.random.PRNGKey(1), (S2, B2, D2), dtype=jnp.float32)
    out2 = jax.block_until_ready(
        positional_encoding_forward(x2, force_pallas=True, tile_rows=8)
    )
    ref2 = x2 + _build_pe_reference(D2, S2)[:, None, :]
    assert jnp.allclose(out2, ref2, atol=1e-5), "mismatch (ragged tiled)"

    # Test 3: long sequence (angles up to a few thousand rad) -- validates the
    # Cody-Waite-reduced cos path against a float64 gold reference.
    S3, B3, D3 = 4992, 2, 32
    x3 = jax.random.normal(jax.random.PRNGKey(2), (S3, B3, D3), dtype=jnp.float32)
    out3 = jax.block_until_ready(positional_encoding_forward(x3, force_pallas=True))
    ref3 = x3 + _build_pe_reference(D3, S3)[:, None, :]
    assert jnp.allclose(out3, ref3, atol=1e-5), "mismatch (long sequence / cos accuracy)"

    # Test 4: already lane-dense width (D=128), bf16 input -- exercises the
    # itemsize-aware tile sizing and dtype casts (no regrouping needed).
    S4, B4, D4 = 64, 2, 128
    x4 = jax.random.normal(jax.random.PRNGKey(3), (S4, B4, D4), dtype=jnp.float32).astype(jnp.bfloat16)
    out4 = jax.block_until_ready(positional_encoding_forward(x4, force_pallas=True))
    ref4 = (x4.astype(jnp.float32) + _build_pe_reference(D4, S4)[:, None, :]).astype(jnp.bfloat16)
    assert out4.dtype == jnp.bfloat16
    assert jnp.allclose(out4.astype(jnp.float32), ref4.astype(jnp.float32), atol=5e-2), "mismatch (bf16)"

    # Test 5: tiny-input auto-dispatch (plain-JAX fused fallback).
    out5 = jax.block_until_ready(positional_encoding_forward(x))
    assert jnp.allclose(out5, ref, atol=1e-5), "mismatch (fallback)"

    print("KERNEL_OK")
</pallas_src>

<mosaic_0001>
module attributes {stable_mosaic.version = 11 : i64} {
  func.func @_pe_add_kernel(%arg0: i32, %arg1: memref<4x128xf32, #tpu.memory_space<vmem>>, %arg2: memref<1x128xf32, #tpu.memory_space<vmem>>, %arg3: memref<1x128xf32, #tpu.memory_space<vmem>>, %arg4: memref<1x128xf32, #tpu.memory_space<vmem>>, %arg5: memref<4x128xf32, #tpu.memory_space<vmem>>) attributes {dimension_semantics = [#tpu.dimension_semantics<parallel>], iteration_bounds = array<i64: 1>, scalar_prefetch = 0 : i64, scratch_operands = 0 : i64, tpu.core_type = #tpu.core_type<tc>, window_params = [{transform_indices = @transform_0, window_bounds = array<i64: 4, 128>}, {pipeline_mode = #tpu.pipeline_mode<synchronous>, transform_indices = @transform_1, window_bounds = array<i64: 1, 128>}, {pipeline_mode = #tpu.pipeline_mode<synchronous>, transform_indices = @transform_2, window_bounds = array<i64: 1, 128>}, {pipeline_mode = #tpu.pipeline_mode<synchronous>, transform_indices = @transform_3, window_bounds = array<i64: 1, 128>}, {transform_indices = @transform_4, window_bounds = array<i64: 4, 128>}]} {
    %c4_i32 = arith.constant 4 : i32
    %0 = arith.muli %arg0, %c4_i32 : i32
    %1 = tpu.iota {dimensions = array<i32: 0>} : vector<4x1xi32>
    %2 = vector.broadcast %0 : i32 to vector<4x1xi32>
    %3 = arith.addi %1, %2 : vector<4x1xi32>
    %4 = arith.sitofp %3 : vector<4x1xi32> to vector<4x1xf32>
    %cst = arith.constant 2.000000e+00 : f32
    %5 = vector.broadcast %cst : f32 to vector<4x1xf32>
    %6 = arith.mulf %4, %5 : vector<4x1xf32>
    %c0 = arith.constant 0 : index
    %c0_0 = arith.constant 0 : index
    %7 = vector.load %arg3[%c0, %c0_0] : memref<1x128xf32, #tpu.memory_space<vmem>>, vector<1x128xf32>
    %8 = vector.broadcast %6 : vector<4x1xf32> to vector<4x128xf32>
    %9 = vector.broadcast %7 : vector<1x128xf32> to vector<4x128xf32>
    %10 = arith.addf %8, %9 : vector<4x128xf32>
    %c0_1 = arith.constant 0 : index
    %c0_2 = arith.constant 0 : index
    %11 = vector.load %arg2[%c0_1, %c0_2] : memref<1x128xf32, #tpu.memory_space<vmem>>, vector<1x128xf32>
    %12 = vector.broadcast %11 : vector<1x128xf32> to vector<4x128xf32>
    %13 = arith.mulf %10, %12 : vector<4x128xf32>
    %cst_3 = arith.constant 0.159154937 : f32
    %14 = vector.broadcast %cst_3 : f32 to vector<4x128xf32>
    %15 = arith.mulf %13, %14 : vector<4x128xf32>
    %cst_4 = arith.constant 5.000000e-01 : f32
    %16 = vector.broadcast %cst_4 : f32 to vector<4x128xf32>
    %17 = arith.addf %15, %16 : vector<4x128xf32>
    %18 = math.floor %17 : vector<4x128xf32>
    %cst_5 = arith.constant 6.281250e+00 : f32
    %19 = vector.broadcast %cst_5 : f32 to vector<4x128xf32>
    %20 = arith.mulf %18, %19 : vector<4x128xf32>
    %21 = arith.subf %13, %20 : vector<4x128xf32>
    %cst_6 = arith.constant 0.00193530717 : f32
    %22 = vector.broadcast %cst_6 : f32 to vector<4x128xf32>
    %23 = arith.mulf %18, %22 : vector<4x128xf32>
    %24 = arith.subf %21, %23 : vector<4x128xf32>
    %c0_7 = arith.constant 0 : index
    %c0_8 = arith.constant 0 : index
    %25 = vector.load %arg4[%c0_7, %c0_8] : memref<1x128xf32, #tpu.memory_space<vmem>>, vector<1x128xf32>
    %26 = vector.broadcast %25 : vector<1x128xf32> to vector<4x128xf32>
    %27 = arith.addf %24, %26 : vector<4x128xf32>
    %28 = math.sin %27 : vector<4x128xf32>
    %c0_9 = arith.constant 0 : index
    %c0_10 = arith.constant 0 : index
    %29 = vector.load %arg1[%c0_9, %c0_10] : memref<4x128xf32, #tpu.memory_space<vmem>>, vector<4x128xf32>
    %30 = arith.addf %29, %28 : vector<4x128xf32>
    %c0_11 = arith.constant 0 : index
    %c0_12 = arith.constant 0 : index
    %31 = vector.load %arg5[%c0_11, %c0_12] : memref<4x128xf32, #tpu.memory_space<vmem>>, vector<4x128xf32>
    tpu.vector_store %arg5[%c0_11, %c0_12], %30 {strides = array<i32>} : memref<4x128xf32, #tpu.memory_space<vmem>>, vector<4x128xf32>,
    return
  }
  func.func @transform_0(%arg0: i32) -> (i32, i32) {
    %c0_i32 = arith.constant 0 : i32
    %c0_i32_0 = arith.constant 0 : i32
    return %arg0, %c0_i32 : i32, i32
  }
  func.func @transform_1(%arg0: i32) -> (i32, i32) {
    %c0_i32 = arith.constant 0 : i32
    %c0_i32_0 = arith.constant 0 : i32
    %c0_i32_1 = arith.constant 0 : i32
    return %c0_i32, %c0_i32_0 : i32, i32
  }
  func.func @transform_2(%arg0: i32) -> (i32, i32) {
    %c0_i32 = arith.constant 0 : i32
    %c0_i32_0 = arith.constant 0 : i32
    %c0_i32_1 = arith.constant 0 : i32
    return %c0_i32, %c0_i32_0 : i32, i32
  }
  func.func @transform_3(%arg0: i32) -> (i32, i32) {
    %c0_i32 = arith.constant 0 : i32
    %c0_i32_0 = arith.constant 0 : i32
    %c0_i32_1 = arith.constant 0 : i32
    return %c0_i32, %c0_i32_0 : i32, i32
  }
  func.func @transform_4(%arg0: i32) -> (i32, i32) {
    %c0_i32 = arith.constant 0 : i32
    %c0_i32_0 = arith.constant 0 : i32
    return %arg0, %c0_i32 : i32, i32
  }
}

</mosaic_0001>

<llo_original>
// kernel: tpu_custom_call.1
$region0: #{tpu_custom_call.1}
  #allocation0 [shape = 'u32[]', space=smem, size = 0x4, offset = 0x4, fixed_abs, tag = 'smem constant byte address 0x4 - core index']
  #allocation1 [shape = 'u32[72,128]{1,0:T(1,128)}', space=vmem, size = 0x9000, scoped, tag = 'internal scratch']
  %s0 = inlined_call_operand.hbm [shape: f32[4,128], index: 0, kind: input, shape index: {}]
  %s1 = inlined_call_operand.hbm [shape: f32[1,128], index: 1, kind: input, shape index: {}]
  %s2 = inlined_call_operand.vmem [shape: f32[1,128], index: 2, kind: input, shape index: {}]
  %s3 = inlined_call_operand.vmem [shape: f32[1,128], index: 3, kind: input, shape index: {}]
  %s4 = inlined_call_operand.hbm [shape: f32[4,128], index: 4, kind: output, shape index: {}]
  %s5 = sld [smem:[#allocation0]]
  $region34: #{tpu_custom_call.1} parent=0
    _
  %s7 = ssub.s32 1, %s5
  %s8 = scalar_select 0, %s7, %s5
  $region1: #{tpu_custom_call.1} parent=0
    #allocation2 [shape = 'u8[2048]{0}', space=vmem, size = 0x800, scoped, tag = 'input window, operand 0, single buffered']
    #allocation3 [shape = 's32[1]{0}', space=sflag, size = 0x4, scoped, tag = 'scoped memory for tpu_custom_call.1']
    #allocation4 [shape = 's32[1]{0}', space=sflag, size = 0x4, scoped, tag = 'scoped memory for tpu_custom_call.1']
    #allocation5 [shape = 'u8[512]{0}', space=vmem, size = 0x400, scoped, tag = 'input window, operand 1, single buffered']
    #allocation6 [shape = 's32[1]{0}', space=sflag, size = 0x4, scoped, tag = 'scoped memory for tpu_custom_call.1']
    #allocation7 [shape = 'u8[2048]{0}', space=vmem, size = 0x800, scoped, tag = 'output window, operand 0, single buffered']
    %9 = vsyncpa [#allocation3], 0
    %10 = vsyncpa [#allocation6], 0
    %11 = vsyncpa [#allocation4], 0
    // Predicated region
    $region2: #{tpu_custom_call.1} parent=1 // pred_check
      _
    $region3: #{tpu_custom_call.1} parent=1 // pred_check_branch
      %13 = sbr.rel (0) target = $region5
    $region4: #{tpu_custom_call.1} parent=1 // pred_region
      %15 = vsyncadd [#allocation3], 0
      %s17 = sshll.u32 %s0, 4
      %s18 = int_to_ptr.hbm [resolvable:$true] %s17
      %s19 = sshll.u32 [#allocation2], 4
      %s20 = int_to_ptr.vmem [resolvable:$true] %s19
      %22 = dma.hbm_to_vmem [thread:$0]  %s18, 64, %s20, [#allocation3]
    $region5: #{tpu_custom_call.1} parent=1 // pred_fallthru
      _
    // Predicated region
    $region6: #{tpu_custom_call.1} parent=1 // pred_check
      _
    $region7: #{tpu_custom_call.1} parent=1 // pred_check_branch
      %24 = sbr.rel (0) target = $region9
    $region8: #{tpu_custom_call.1} parent=1 // pred_region
      %26 = vsyncadd [#allocation6], 0
      %s28 = sshll.u32 %s1, 4
      %s29 = int_to_ptr.hbm [resolvable:$true] %s28
      %s30 = sshll.u32 [#allocation5], 4
      %s31 = int_to_ptr.vmem [resolvable:$true] %s30
      %33 = dma.hbm_to_vmem [thread:$0]  %s29, 16, %s31, [#allocation6]
    $region9: #{tpu_custom_call.1} parent=1 // pred_fallthru
      _
    // Predicated region
    $region10: #{tpu_custom_call.1} parent=1 // pred_check
      _
    $region11: #{tpu_custom_call.1} parent=1 // pred_check_branch
      %35 = sbr.rel (0) target = $region13
    $region12: #{tpu_custom_call.1} parent=1 // pred_region
      _
    $region13: #{tpu_custom_call.1} parent=1 // pred_fallthru
      _
    // Predicated region
    $region14: #{tpu_custom_call.1} parent=1 // pred_check
      _
    $region15: #{tpu_custom_call.1} parent=1 // pred_check_branch
      %37 = sbr.rel (0) target = $region17
    $region16: #{tpu_custom_call.1} parent=1 // pred_region
      _
    $region17: #{tpu_custom_call.1} parent=1 // pred_fallthru
      _
    // Predicated region
    $region18: #{tpu_custom_call.1} parent=1 // pred_check
      _
    $region19: #{tpu_custom_call.1} parent=1 // pred_check_branch
      %39 = sbr.rel (0) target = $region21
    $region20: #{tpu_custom_call.1} parent=1 // pred_region
      %41 = dma.done [#allocation3], 64
    $region21: #{tpu_custom_call.1} parent=1 // pred_fallthru
      _
    // Predicated region
    $region22: #{tpu_custom_call.1} parent=1 // pred_check
      _
    $region23: #{tpu_custom_call.1} parent=1 // pred_check_branch
      %43 = sbr.rel (0) target = $region25
    $region24: #{tpu_custom_call.1} parent=1 // pred_region
      %45 = dma.done [#allocation6], 16
    $region25: #{tpu_custom_call.1} parent=1 // pred_fallthru
      _
    %s46 = smul.u32 0, 4
    %v47 = vlaneseq
    %v48 = vshrl.u32 %v47, 7
    %v49 = vstv %s46
    %v50 = vadd.s32 %v48, %v49
    %v51 = vcvt.s32.f32 %v50
    %v52 = vmul.f32 %v51, 2.0
    %v53 = vld [vmem:[%s2] sm:$0x1]
    %v55 = vperm.slane %v53, 0
    %v57 = vadd.f32 %v52, %v55
    %v58 = vld [vmem:[#allocation5] sm:$0x1]
    %v60 = vperm.slane %v58, 0
    %v62 = vmul.f32 %v57, %v60
    %v63 = vmul.f32 %v62, 0.15915494
    %v64 = vadd.f32 %v63, 0.5
    %v65 = vfloor.f32 %v64
    %v66 = vmul.f32 %v65, 6.28125
    %v67 = vsub.f32 %v62, %v66
    %v68 = vmul.f32 %v65, 0.0019353072
    %v69 = vsub.f32 %v67, %v68
    %v70 = vld [vmem:[%s3] sm:$0x1]
    %v72 = vperm.slane %v70, 0
    %v74 = vadd.f32 %v69, %v72
    %v75 = vand.u32 2147483647, %v74
    %vm76 = vcmp.le.f32.partialorder %v75, 0.7853982
    %vm77 = vcmp.lt.s32.totalorder %v74, 0
    %v78 = vand.u32 %v74, 2139095040
    %v79 = vshrl.u32 %v78, 23
    %v80 = vsub.s32 %v79, 127
    %v81 = vand.u32 2147483647, %v74
    %v82 = vand.u32 %v81, 8388607
    %v83 = vor.u32 %v82, 8388608
    %v84 = vsub.s32 0, %v83
    %v85 = vadd.s32 %v80, 1
    %vm86 = vcmp.gt.s32.totalorder %v85, 0
    %v87 = vsel %vm86, %v85, 0
    %v88 = vshrl.u32 %v87, 5
    %v89 = vand.u32 %v87, 31
    %v90 = vsub.s32 32, %v89
    %v91 = vshrl.u32 683565275, %v90
    %v92 = vshll.u32 683565275, %v89
    %v93 = vshrl.u32 2475754826, %v90
    %v94 = vor.u32 %v92, %v93
    %v95 = vshll.u32 2475754826, %v89
    %v96 = vshrl.u32 2131351028, %v90
    %v97 = vor.u32 %v95, %v96
    %v98 = vshll.u32 2131351028, %v89
    %v99 = vshrl.u32 2102212464, %v90
    %v100 = vor.u32 %v98, %v99
    %v101 = vshll.u32 2102212464, %v89
    %v102 = vshrl.u32 920167782, %v90
    %v103 = vor.u32 %v101, %v102
    %v104 = vshll.u32 920167782, %v89
    %v105 = vshrl.u32 1326507024, %v90
    %v106 = vor.u32 %v104, %v105
    %vm107 = vcmp.lt.s32.totalorder %v88, 1
    %vm108 = vcmp.lt.s32.totalorder %v88, 2
    %vm109 = vcmp.lt.s32.totalorder %v88, 3
    %vm110 = vcmp.lt.s32.totalorder %v88, 4
    %v111 = vsel %vm107, %v91, %v94
    %v112 = vsel %vm110, %v100, 2102212464
    %v113 = vsel %vm109, %v97, %v112
    %v114 = vsel %vm108, %v111, %v113
    %v115 = vsel %vm107, %v94, %v97
    %v116 = vsel %vm110, %v103, 920167782
    %v117 = vsel %vm109, %v100, %v116
    %v118 = vsel %vm108, %v115, %v117
    %v119 = vsel %vm107, %v97, %v100
    %v120 = vsel %vm110, %v106, 1326507024
    %v121 = vsel %vm109, %v103, %v120
    %v122 = vsel %vm108, %v119, %v121
    %v123 = vshll.u32 %v83, 8
    %v124 = vand.u32 %v123, 65535
    %v125 = vshrl.u32 %v123, 16
    %v126 = vand.u32 %v122, 65535
    %v127 = vshrl.u32 %v122, 16
    %v128 = vmul.u32 %v124, %v126
    %v129 = vmul.u32 %v124, %v127
    %v130 = vmul.u32 %v125, %v126
    %v131 = vmul.u32 %v125, %v127
    %v132 = vshll.u32 %v129, 16
    %v133 = vshrl.u32 %v129, 16
    %v134 = vshll.u32 %v130, 16
    %v135 = vshrl.u32 %v130, 16
    %vm136 = vc.u32 %v128, %v132
    %v137 = vsel %vm136, 1, 0
    %v138 = vadd.s32 %v128, %v132
    %v139 = vadd.s32 %v131, %v137
    %vm140 = vc.u32 %v138, %v134
    %v141 = vsel %vm140, 1, 0
    %v142 = vadd.s32 %v138, %v134
    %v143 = vadd.s32 %v139, %v141
    %v144 = vadd.s32 %v143, %v133
    %v145 = vadd.s32 %v144, %v135
    %v146 = vand.u32 %v123, 65535
    %v147 = vshrl.u32 %v123, 16
    %v148 = vand.u32 %v118, 65535
    %v149 = vshrl.u32 %v118, 16
    %v150 = vmul.u32 %v146, %v148
    %v151 = vmul.u32 %v146, %v149
    %v152 = vmul.u32 %v147, %v148
    %v153 = vmul.u32 %v147, %v149
    %v154 = vshll.u32 %v151, 16
    %v155 = vshrl.u32 %v151, 16
    %v156 = vshll.u32 %v152, 16
    %v157 = vshrl.u32 %v152, 16
    %vm158 = vc.u32 %v150, %v154
    %v159 = vsel %vm158, 1, 0
    %v160 = vadd.s32 %v150, %v154
    %v161 = vadd.s32 %v153, %v159
    %vm162 = vc.u32 %v160, %v156
    %v163 = vsel %vm162, 1, 0
    %v164 = vadd.s32 %v160, %v156
    %v165 = vadd.s32 %v161, %v163
    %v166 = vadd.s32 %v165, %v155
    %v167 = vadd.s32 %v166, %v157
    %v168 = vmul.u32 %v123, %v114
    %v169 = vadd.s32 %v145, %v164
    %vm170 = vc.u32 %v145, %v164
    %v171 = vadd.s32 %v167, 1
    %v172 = vsel %vm170, %v171, %v167
    %v173 = vadd.s32 %v168, %v172
    %v174 = vadd.s32 %v173, 536870912
    %v175 = vshrl.u32 %v174, 30
    %v176 = vshll.u32 %v175, 30
    %v177 = vsub.s32 %v173, %v176
    %vm178 = vcmp.lt.s32.totalorder %v177, 0
    %v179 = vsub.s32 0, %v177
    %v180 = vsel %vm178, %v179, %v177
    %v181 = vclz %v180
    %v182 = vsub.s32 %v181, 2
    %vm183 = vcmp.gt.s32.totalorder 0, %v182
    %v184 = vsel %vm183, 0, %v182
    %v185 = vsub.s32 32, %v184
    %v186 = vshll.u32 %v177, %v184
    %v187 = vshrl.u32 %v169, %v185
    %v188 = vor.u32 %v186, %v187
    %v189 = vsub.s32 4294967266, %v184
    %v190 = vadd.s32 %v189, 127
    %v191 = vshll.u32 %v190, 23
    %v192 = vor.u32 4788187, %v191
    %v193 = vand.u32 2147483647, %v192
    %v195 = vcvt.s32.f32 %v188
    %v196 = vmul.f32 %v195, %v193
    %v197 = vxor.u32 %v196, 2147483648
    %v198 = vsel %vm77, %v197, %v196
    %v199 = vsub.s32 4, %v175
    %v200 = vsel %vm77, %v199, %v175
    %v201 = vsel %vm76, %v74, %v198
    %v202 = vsel %vm76, 0, %v200
    %v203 = vmul.f32 %v201, %v201
    %v204 = vmul.f32 %v203, -0.001358992
    %v205 = vadd.f32 %v204, 0.041655596
    %v206 = vmul.f32 %v203, %v205
    %v207 = vadd.f32 %v206, -0.4999988
    %v208 = vmul.f32 %v203, %v207
    %v209 = vadd.f32 1.0, %v208
    %v210 = vmul.f32 %v201, %v201
    %v211 = vmul.f32 %v210, -0.00019511016
    %v212 = vadd.f32 %v211, 0.008332121
    %v213 = vmul.f32 %v210, %v212
    %v214 = vadd.f32 %v213, -0.16666654
    %v215 = vmul.f32 %v210, %v214
    %v216 = vadd.f32 %v215, 1.0
    %v217 = vmul.f32 %v216, %v201
    %vm218 = vweird.f32 %v74
    %v219 = vadd.s32 %v202, 3
    %v220 = vand.u32 %v219, 3
    %vm221 = vcmp.lt.s32.totalorder %v220, 2
    %vm222 = vcmp.eq.s32.totalorder %v220, 0
    %v223 = vxor.u32 %v217, 2147483648
    %v224 = vsel %vm222, %v209, %v223
    %vm225 = vcmp.eq.s32.totalorder %v220, 2
    %v226 = vxor.u32 %v209, 2147483648
    %v227 = vsel %vm225, %v226, %v217
    %v228 = vsel %vm221, %v224, %v227
    %v229 = vsel %vm218, nan, %v228
    %v230 = vld [vmem:[#allocation2] sm:$0xf]
    %v231 = vadd.f32 %v230, %v229
    %232 = vst [vmem:[#allocation7] sm:$0xf] %v231
    // Predicated region
    $region26: #{tpu_custom_call.1} parent=1 // pred_check
      _
    $region27: #{tpu_custom_call.1} parent=1 // pred_check_branch
      %234 = sbr.rel (0) target = $region29
    $region28: #{tpu_custom_call.1} parent=1 // pred_region
      %236 = vsyncadd [#allocation4], 0
      %s238 = sshll.u32 [#allocation7], 4
      %s239 = int_to_ptr.vmem [resolvable:$true] %s238
      %s240 = sshll.u32 %s4, 4
      %s241 = int_to_ptr.hbm [resolvable:$true] %s240
      %243 = dma.vmem_to_hbm [thread:$0]  %s239, 64, %s241, [#allocation4]
    $region29: #{tpu_custom_call.1} parent=1 // pred_fallthru
      _
    // Predicated region
    $region30: #{tpu_custom_call.1} parent=1 // pred_check
      _
    $region31: #{tpu_custom_call.1} parent=1 // pred_check_branch
      %245 = sbr.rel (0) target = $region33
    $region32: #{tpu_custom_call.1} parent=1 // pred_region
      %247 = dma.done [#allocation4], 64
    $region33: #{tpu_custom_call.1} parent=1 // pred_fallthru
      _
    %248 = vsyncpa [#allocation3], 1
    %249 = vsyncpa [#allocation6], 1
    %250 = vsyncpa [#allocation4], 1

</llo_original>
